<compile_context>
chip_gen: v7x
topology: tpu7x:2x2x1
jax: 0.10.0
libtpu: 0.0.40
codegen_flags: <defaults>
</compile_context>

<pallas_src>
import functools

import jax
import jax.numpy as jnp
import numpy as np
from jax.experimental import pallas as pl
from jax.experimental.pallas import tpu as pltpu


def _loss_atal_kernel(params_ref, student_ref, teacher_ref, center_ref,
                      loss_ref, cols_ref, *, ncrops, n_chunks, inv_b):
    inv_s_temp = params_ref[0]      # 1 / student_temp
    inv_t_temp = params_ref[1]      # 1 / teacher_temp (epoch-dependent)

    c = center_ref[...].astype(jnp.float32)                  # (1, D)

    q_sum = None          # sum over teacher chunks of softmax probs
    lp_sum = None         # sum over student crops of log-softmax
    col_sum = None        # raw-teacher column sums (for the center EMA)
    diag = jnp.float32(0.0)

    # Trace-time unrolled loop: per-chunk softmaxes; nothing large stays live
    # beyond q_sum / lp_sum and the current chunk's temporaries.
    for idx in range(max(ncrops, n_chunks)):
        logp = None
        if idx < ncrops:
            s = student_ref[idx].astype(jnp.float32) * inv_s_temp     # (RB, D)
            s = s - jnp.max(s, axis=-1, keepdims=True)
            logp = s - jnp.log(jnp.sum(jnp.exp(s), axis=-1, keepdims=True))
            lp_sum = logp if lp_sum is None else lp_sum + logp
        if idx < n_chunks:
            t_raw = teacher_ref[idx].astype(jnp.float32)              # (RB, D)
            t_col = jnp.sum(t_raw, axis=0, keepdims=True)             # (1, D)
            col_sum = t_col if col_sum is None else col_sum + t_col
            t = (t_raw - c) * inv_t_temp
            t = t - jnp.max(t, axis=-1, keepdims=True)
            t_exp = jnp.exp(t)
            q = t_exp * pl.reciprocal(
                jnp.sum(t_exp, axis=-1, keepdims=True), approx=True)
            q_sum = q if q_sum is None else q_sum + q
            if logp is not None:                # diagonal (iq == v) correction
                diag = diag + jnp.sum(q * logp)

    # sum over (iq, v != iq) pairs of sum_{b,d} -q_iq * logp_v for this block,
    # pre-scaled by 1/B so summing blocks reproduces the per-pair mean().
    block_loss = (diag - jnp.sum(q_sum * lp_sum)) * inv_b
    loss_ref[...] = jnp.broadcast_to(block_loss, (1, 1, 128)).astype(jnp.float32)
    cols_ref[...] = col_sum.reshape(1, 1, -1)


def _pick_row_block(batch_per_crop, out_dim, ncrops, n_chunks, itemsize,
                    vmem_budget_bytes=16 * 1024 * 1024, min_blocks=2):
    """Largest row block that (a) fits a conservative VMEM budget (safe under
    the default scoped limit, incl. v7x's 64 MiB VMEM), (b) respects dtype
    sublane packing, and (c) when possible yields >= min_blocks grid steps so
    the v7x megacore can split the (parallel) row axis across both cores."""
    sub = 8 * max(1, 4 // itemsize)          # f32: 8, bf16: 16, int8: 32

    def footprint(rb):
        inputs = (ncrops + n_chunks) * rb * out_dim * itemsize * 2   # dbl-buf
        live_f32 = 6 * rb * out_dim * 4     # q_sum, lp_sum, q, logp, exp temps
        return inputs + live_f32

    cands = [batch_per_crop] + [
        rb for rb in (4096, 2048, 1024, 512, 256, 128, 64, 32, 16, 8)
        if rb < batch_per_crop and batch_per_crop % rb == 0 and rb % sub == 0]
    fitting = [rb for rb in cands if footprint(rb) <= vmem_budget_bytes]
    if not fitting:
        return sub if batch_per_crop % sub == 0 else batch_per_crop
    for rb in fitting:                      # descending size order
        if batch_per_crop // rb >= min_blocks:
            return rb
    return fitting[0]


@functools.partial(jax.jit, static_argnames=("ncrops", "n_chunks", "row_block"))
def _loss_atal_forward(student, teacher, center, params, momentum, *,
                       ncrops, n_chunks, row_block):
    total_s, D = student.shape
    B = total_s // ncrops
    s3 = student.reshape(ncrops, B, D)
    t3 = teacher.reshape(n_chunks, B, D)
    n_terms = n_chunks * ncrops - min(n_chunks, ncrops)
    grid = B // row_block

    kernel = functools.partial(
        _loss_atal_kernel,
        ncrops=ncrops, n_chunks=n_chunks, inv_b=1.0 / B)

    partial_loss, partial_cols = pl.pallas_call(
        kernel,
        out_shape=(jax.ShapeDtypeStruct((grid, 1, 128), jnp.float32),
                   jax.ShapeDtypeStruct((grid, 1, D), jnp.float32)),
        grid_spec=pltpu.PrefetchScalarGridSpec(
            num_scalar_prefetch=0,
            grid=(grid,),
            in_specs=[
                pl.BlockSpec(memory_space=pltpu.MemorySpace.SMEM),    # params
                pl.BlockSpec((ncrops, row_block, D), lambda i: (0, i, 0)),
                pl.BlockSpec((n_chunks, row_block, D), lambda i: (0, i, 0)),
                pl.BlockSpec((1, D), lambda i: (0, 0)),               # center
            ],
            out_specs=(
                pl.BlockSpec((1, 1, 128), lambda i: (i, 0, 0)),   # block loss
                pl.BlockSpec((1, 1, D), lambda i: (i, 0, 0)),     # block colsum
            )),
        compiler_params=pltpu.CompilerParams(
            dimension_semantics=("parallel",)),
    )(params, s3, t3, center)

    # Tiny finalization fused into the jit (XLA handles it; keeps the grid
    # axis fully parallel inside the kernel).
    loss = jnp.sum(partial_loss[:, 0, 0]) / n_terms
    # TODO(synk): dist.all_reduce / world_size assumed = 1 (single device).
    batch_center = (jnp.sum(partial_cols, axis=(0, 1), keepdims=False)[None, :]
                    / (n_chunks * B))
    new_center = center * momentum + batch_center * (1.0 - momentum)
    return loss, new_center


class LossATALPallas:
    """JAX/Pallas re-implementation of LossATAL's forward pass."""

    def __init__(self, out_dim, ncrops, warmup_teacher_temp, teacher_temp,
                 warmup_teacher_temp_epochs, nepochs,
                 student_temp=0.1, center_momentum=0.9):
        self.out_dim = out_dim
        self.ncrops = ncrops
        self.student_temp = float(student_temp)
        self.center_momentum = float(center_momentum)
        self.center = jnp.zeros((1, out_dim), jnp.float32)
        self.teacher_temp_schedule = np.concatenate((
            np.linspace(warmup_teacher_temp, teacher_temp,
                        warmup_teacher_temp_epochs),
            np.ones(nepochs - warmup_teacher_temp_epochs) * teacher_temp))
        self.curr_loss = 0.0

    def forward(self, student_output, teacher_output, epoch, row_block=None):
        n_chunks = 4
        assert teacher_output.shape[0] % n_chunks == 0
        assert student_output.shape[0] % self.ncrops == 0
        B_t = teacher_output.shape[0] // n_chunks
        B_s = student_output.shape[0] // self.ncrops
        assert B_t == B_s, "teacher/student per-chunk batch sizes must match"
        assert student_output.shape[1] == self.out_dim
        B, D = B_t, self.out_dim

        if row_block is None:
            row_block = _pick_row_block(
                B, D, self.ncrops, n_chunks,
                jnp.dtype(student_output.dtype).itemsize)
        assert B % row_block == 0, "row_block must divide the per-crop batch"
        assert row_block == B or row_block % 8 == 0, \
            "row_block must be a multiple of 8 (or the full per-crop batch)"

        teacher_temp = float(self.teacher_temp_schedule[epoch])
        # Runtime scalars (SMEM) -> no recompile when teacher_temp changes.
        params = jnp.array([1.0 / self.student_temp,
                            1.0 / teacher_temp], dtype=jnp.float32)
        momentum = jnp.float32(self.center_momentum)

        loss, new_center = _loss_atal_forward(
            student_output, teacher_output, self.center, params, momentum,
            ncrops=self.ncrops, n_chunks=n_chunks, row_block=row_block)

        self.center = new_center
        self.curr_loss = loss
        return loss

    def item(self):
        return self.curr_loss


# ---------------- pure-JAX reference (for correctness check) ----------------
def _reference_forward(student_output, teacher_output, center, epoch,
                       ncrops, student_temp, teacher_temp_schedule,
                       center_momentum):
    temp = float(teacher_temp_schedule[epoch])
    student_out = student_output / student_temp
    student_chunks = jnp.split(student_out, ncrops, axis=0)
    teacher_out = jax.nn.softmax((teacher_output - center) / temp, axis=-1)
    teacher_chunks = jnp.split(teacher_out, 4, axis=0)

    total_loss = 0.0
    n_loss_terms = 0
    for iq, q in enumerate(teacher_chunks):
        for v in range(len(student_chunks)):
            if v == iq:
                continue
            loss = jnp.sum(-q * jax.nn.log_softmax(student_chunks[v], axis=-1),
                           axis=-1)
            total_loss += jnp.mean(loss)
            n_loss_terms += 1
    total_loss /= n_loss_terms

    batch_center = jnp.sum(teacher_output, axis=0, keepdims=True)
    batch_center = batch_center / (teacher_output.shape[0] * 1)  # world_size=1
    new_center = center * center_momentum + batch_center * (1 - center_momentum)
    return total_loss, new_center


if __name__ == "__main__":
    out_dim = 128
    ncrops = 4          # student crops (== teacher chunks so batch sizes match)
    batch_per_crop = 16
    warmup_teacher_temp = 0.04
    teacher_temp = 0.07
    warmup_teacher_temp_epochs = 5
    nepochs = 20
    epoch = 3

    key = jax.random.PRNGKey(0)
    k_s, k_t = jax.random.split(key)
    student_output = jax.random.normal(
        k_s, (ncrops * batch_per_crop, out_dim), jnp.float32)
    teacher_output = jax.random.normal(
        k_t, (4 * batch_per_crop, out_dim), jnp.float32)

    # ---- f32 path, forced multi-step grid (row_block=8 -> 2 grid steps) ----
    loss_mod = LossATALPallas(out_dim, ncrops, warmup_teacher_temp,
                              teacher_temp, warmup_teacher_temp_epochs,
                              nepochs)
    init_center = loss_mod.center
    loss = loss_mod.forward(student_output, teacher_output, epoch, row_block=8)
    loss = jax.block_until_ready(loss)
    new_center = jax.block_until_ready(loss_mod.center)

    ref_loss, ref_center = _reference_forward(
        student_output, teacher_output, init_center, epoch, ncrops,
        loss_mod.student_temp, loss_mod.teacher_temp_schedule,
        loss_mod.center_momentum)

    # tolerance loosened slightly vs exact math because of approx reciprocal
    np.testing.assert_allclose(np.asarray(loss), np.asarray(ref_loss),
                               rtol=5e-3, atol=1e-3)
    np.testing.assert_allclose(np.asarray(new_center), np.asarray(ref_center),
                               rtol=1e-5, atol=1e-5)

    # ---- bf16 inputs (halves HBM traffic; math stays f32 in-kernel) ----
    loss_mod_bf16 = LossATALPallas(out_dim, ncrops, warmup_teacher_temp,
                                   teacher_temp, warmup_teacher_temp_epochs,
                                   nepochs)
    s_bf16 = student_output.astype(jnp.bfloat16)
    t_bf16 = teacher_output.astype(jnp.bfloat16)
    loss_bf16 = jax.block_until_ready(
        loss_mod_bf16.forward(s_bf16, t_bf16, epoch))
    center_bf16 = jax.block_until_ready(loss_mod_bf16.center)

    ref_loss_bf16, ref_center_bf16 = _reference_forward(
        s_bf16.astype(jnp.float32), t_bf16.astype(jnp.float32),
        jnp.zeros((1, out_dim), jnp.float32), epoch, ncrops,
        loss_mod_bf16.student_temp, loss_mod_bf16.teacher_temp_schedule,
        loss_mod_bf16.center_momentum)

    np.testing.assert_allclose(np.asarray(loss_bf16),
                               np.asarray(ref_loss_bf16),
                               rtol=1e-2, atol=1e-2)
    np.testing.assert_allclose(np.asarray(center_bf16),
                               np.asarray(ref_center_bf16),
                               rtol=1e-5, atol=1e-5)

    print("KERNEL_OK")
</pallas_src>

<mosaic_0001>
module attributes {stable_mosaic.version = 11 : i64} {
  func.func @_loss_atal_kernel(%arg0: i32, %arg1: memref<2xf32, #tpu.memory_space<smem>>, %arg2: memref<4x8x128xf32, #tpu.memory_space<vmem>>, %arg3: memref<4x8x128xf32, #tpu.memory_space<vmem>>, %arg4: memref<1x128xf32, #tpu.memory_space<vmem>>, %arg5: memref<1x1x128xf32, #tpu.memory_space<vmem>>, %arg6: memref<1x1x128xf32, #tpu.memory_space<vmem>>) attributes {dimension_semantics = [#tpu.dimension_semantics<parallel>], iteration_bounds = array<i64: 2>, scalar_prefetch = 0 : i64, scratch_operands = 0 : i64, tpu.core_type = #tpu.core_type<tc>, window_params = [{transform_indices = @transform_0, window_bounds = array<i64: 2>}, {transform_indices = @transform_1, window_bounds = array<i64: 4, 8, 128>}, {transform_indices = @transform_2, window_bounds = array<i64: 4, 8, 128>}, {pipeline_mode = #tpu.pipeline_mode<synchronous>, transform_indices = @transform_3, window_bounds = array<i64: 1, 128>}, {transform_indices = @transform_4, window_bounds = array<i64: 1, 1, 128>}, {transform_indices = @transform_5, window_bounds = array<i64: 1, 1, 128>}]} {
    %c0 = arith.constant 0 : index
    %0 = memref.load %arg1[%c0] : memref<2xf32, #tpu.memory_space<smem>>
    %c1 = arith.constant 1 : index
    %1 = memref.load %arg1[%c1] : memref<2xf32, #tpu.memory_space<smem>>
    %c0_0 = arith.constant 0 : index
    %c0_1 = arith.constant 0 : index
    %2 = vector.load %arg4[%c0_0, %c0_1] : memref<1x128xf32, #tpu.memory_space<vmem>>, vector<1x128xf32>
    %c0_2 = arith.constant 0 : index
    %c0_3 = arith.constant 0 : index
    %c0_4 = arith.constant 0 : index
    %3 = vector.load %arg2[%c0_2, %c0_3, %c0_4] : memref<4x8x128xf32, #tpu.memory_space<vmem>>, vector<1x8x128xf32>
    %4 = vector.shape_cast %3 : vector<1x8x128xf32> to vector<8x128xf32>
    %5 = vector.broadcast %0 : f32 to vector<8x128xf32>
    %6 = arith.mulf %4, %5 : vector<8x128xf32>
    %cst = arith.constant dense<0xFF800000> : vector<8xf32>
    %7 = vector.multi_reduction <maximumf>, %6, %cst [1] : vector<8x128xf32> to vector<8xf32>
    %8 = vector.shape_cast %7 : vector<8xf32> to vector<8x1xf32>
    %9 = vector.broadcast %8 : vector<8x1xf32> to vector<8x128xf32>
    %10 = arith.subf %6, %9 : vector<8x128xf32>
    %11 = math.exp %10 : vector<8x128xf32>
    %cst_5 = arith.constant dense<0.000000e+00> : vector<8xf32>
    %12 = vector.multi_reduction <add>, %11, %cst_5 [1] : vector<8x128xf32> to vector<8xf32>
    %13 = vector.shape_cast %12 : vector<8xf32> to vector<8x1xf32>
    %14 = math.log %13 : vector<8x1xf32>
    %15 = vector.broadcast %14 : vector<8x1xf32> to vector<8x128xf32>
    %16 = arith.subf %10, %15 : vector<8x128xf32>
    %c0_6 = arith.constant 0 : index
    %c0_7 = arith.constant 0 : index
    %c0_8 = arith.constant 0 : index
    %17 = vector.load %arg3[%c0_6, %c0_7, %c0_8] : memref<4x8x128xf32, #tpu.memory_space<vmem>>, vector<1x8x128xf32>
    %18 = vector.shape_cast %17 : vector<1x8x128xf32> to vector<8x128xf32>
    %cst_9 = arith.constant dense<0.000000e+00> : vector<128xf32>
    %19 = vector.multi_reduction <add>, %18, %cst_9 [0] : vector<8x128xf32> to vector<128xf32>
    %20 = vector.shape_cast %19 : vector<128xf32> to vector<1x128xf32>
    %21 = vector.broadcast %2 : vector<1x128xf32> to vector<8x128xf32>
    %22 = arith.subf %18, %21 : vector<8x128xf32>
    %23 = vector.broadcast %1 : f32 to vector<8x128xf32>
    %24 = arith.mulf %22, %23 : vector<8x128xf32>
    %cst_10 = arith.constant dense<0xFF800000> : vector<8xf32>
    %25 = vector.multi_reduction <maximumf>, %24, %cst_10 [1] : vector<8x128xf32> to vector<8xf32>
    %26 = vector.shape_cast %25 : vector<8xf32> to vector<8x1xf32>
    %27 = vector.broadcast %26 : vector<8x1xf32> to vector<8x128xf32>
    %28 = arith.subf %24, %27 : vector<8x128xf32>
    %29 = math.exp %28 : vector<8x128xf32>
    %cst_11 = arith.constant dense<0.000000e+00> : vector<8xf32>
    %30 = vector.multi_reduction <add>, %29, %cst_11 [1] : vector<8x128xf32> to vector<8xf32>
    %31 = vector.shape_cast %30 : vector<8xf32> to vector<8x1xf32>
    %32 = tpu.reciprocal %31 {approx = true} : vector<8x1xf32> -> vector<8x1xf32>
    %33 = vector.broadcast %32 : vector<8x1xf32> to vector<8x128xf32>
    %34 = arith.mulf %29, %33 : vector<8x128xf32>
    %35 = arith.mulf %34, %16 : vector<8x128xf32>
    %36 = vector.shape_cast %35 : vector<8x128xf32> to vector<1x8x128xf32>
    %cst_12 = arith.constant dense<0.000000e+00> : vector<1xf32>
    %37 = vector.multi_reduction <add>, %36, %cst_12 [1, 2] : vector<1x8x128xf32> to vector<1xf32>
    %38 = vector.shape_cast %37 : vector<1xf32> to vector<1x1x1xf32>
    %39 = vector.extract %38[0, 0, 0] : f32 from vector<1x1x1xf32>
    %cst_13 = arith.constant 0.000000e+00 : f32
    %40 = arith.addf %cst_13, %39 : f32
    %c1_14 = arith.constant 1 : index
    %c0_15 = arith.constant 0 : index
    %c0_16 = arith.constant 0 : index
    %41 = vector.load %arg2[%c1_14, %c0_15, %c0_16] : memref<4x8x128xf32, #tpu.memory_space<vmem>>, vector<1x8x128xf32>
    %42 = vector.shape_cast %41 : vector<1x8x128xf32> to vector<8x128xf32>
    %43 = vector.broadcast %0 : f32 to vector<8x128xf32>
    %44 = arith.mulf %42, %43 : vector<8x128xf32>
    %cst_17 = arith.constant dense<0xFF800000> : vector<8xf32>
    %45 = vector.multi_reduction <maximumf>, %44, %cst_17 [1] : vector<8x128xf32> to vector<8xf32>
    %46 = vector.shape_cast %45 : vector<8xf32> to vector<8x1xf32>
    %47 = vector.broadcast %46 : vector<8x1xf32> to vector<8x128xf32>
    %48 = arith.subf %44, %47 : vector<8x128xf32>
    %49 = math.exp %48 : vector<8x128xf32>
    %cst_18 = arith.constant dense<0.000000e+00> : vector<8xf32>
    %50 = vector.multi_reduction <add>, %49, %cst_18 [1] : vector<8x128xf32> to vector<8xf32>
    %51 = vector.shape_cast %50 : vector<8xf32> to vector<8x1xf32>
    %52 = math.log %51 : vector<8x1xf32>
    %53 = vector.broadcast %52 : vector<8x1xf32> to vector<8x128xf32>
    %54 = arith.subf %48, %53 : vector<8x128xf32>
    %55 = arith.addf %16, %54 : vector<8x128xf32>
    %c1_19 = arith.constant 1 : index
    %c0_20 = arith.constant 0 : index
    %c0_21 = arith.constant 0 : index
    %56 = vector.load %arg3[%c1_19, %c0_20, %c0_21] : memref<4x8x128xf32, #tpu.memory_space<vmem>>, vector<1x8x128xf32>
    %57 = vector.shape_cast %56 : vector<1x8x128xf32> to vector<8x128xf32>
    %cst_22 = arith.constant dense<0.000000e+00> : vector<128xf32>
    %58 = vector.multi_reduction <add>, %57, %cst_22 [0] : vector<8x128xf32> to vector<128xf32>
    %59 = vector.shape_cast %58 : vector<128xf32> to vector<1x128xf32>
    %60 = arith.addf %20, %59 : vector<1x128xf32>
    %61 = vector.broadcast %2 : vector<1x128xf32> to vector<8x128xf32>
    %62 = arith.subf %57, %61 : vector<8x128xf32>
    %63 = vector.broadcast %1 : f32 to vector<8x128xf32>
    %64 = arith.mulf %62, %63 : vector<8x128xf32>
    %cst_23 = arith.constant dense<0xFF800000> : vector<8xf32>
    %65 = vector.multi_reduction <maximumf>, %64, %cst_23 [1] : vector<8x128xf32> to vector<8xf32>
    %66 = vector.shape_cast %65 : vector<8xf32> to vector<8x1xf32>
    %67 = vector.broadcast %66 : vector<8x1xf32> to vector<8x128xf32>
    %68 = arith.subf %64, %67 : vector<8x128xf32>
    %69 = math.exp %68 : vector<8x128xf32>
    %cst_24 = arith.constant dense<0.000000e+00> : vector<8xf32>
    %70 = vector.multi_reduction <add>, %69, %cst_24 [1] : vector<8x128xf32> to vector<8xf32>
    %71 = vector.shape_cast %70 : vector<8xf32> to vector<8x1xf32>
    %72 = tpu.reciprocal %71 {approx = true} : vector<8x1xf32> -> vector<8x1xf32>
    %73 = vector.broadcast %72 : vector<8x1xf32> to vector<8x128xf32>
    %74 = arith.mulf %69, %73 : vector<8x128xf32>
    %75 = arith.addf %34, %74 : vector<8x128xf32>
    %76 = arith.mulf %74, %54 : vector<8x128xf32>
    %77 = vector.shape_cast %76 : vector<8x128xf32> to vector<1x8x128xf32>
    %cst_25 = arith.constant dense<0.000000e+00> : vector<1xf32>
    %78 = vector.multi_reduction <add>, %77, %cst_25 [1, 2] : vector<1x8x128xf32> to vector<1xf32>
    %79 = vector.shape_cast %78 : vector<1xf32> to vector<1x1x1xf32>
    %80 = vector.extract %79[0, 0, 0] : f32 from vector<1x1x1xf32>
    %81 = arith.addf %40, %80 : f32
    %c2 = arith.constant 2 : index
    %c0_26 = arith.constant 0 : index
    %c0_27 = arith.constant 0 : index
    %82 = vector.load %arg2[%c2, %c0_26, %c0_27] : memref<4x8x128xf32, #tpu.memory_space<vmem>>, vector<1x8x128xf32>
    %83 = vector.shape_cast %82 : vector<1x8x128xf32> to vector<8x128xf32>
    %84 = vector.broadcast %0 : f32 to vector<8x128xf32>
    %85 = arith.mulf %83, %84 : vector<8x128xf32>
    %cst_28 = arith.constant dense<0xFF800000> : vector<8xf32>
    %86 = vector.multi_reduction <maximumf>, %85, %cst_28 [1] : vector<8x128xf32> to vector<8xf32>
    %87 = vector.shape_cast %86 : vector<8xf32> to vector<8x1xf32>
    %88 = vector.broadcast %87 : vector<8x1xf32> to vector<8x128xf32>
    %89 = arith.subf %85, %88 : vector<8x128xf32>
    %90 = math.exp %89 : vector<8x128xf32>
    %cst_29 = arith.constant dense<0.000000e+00> : vector<8xf32>
    %91 = vector.multi_reduction <add>, %90, %cst_29 [1] : vector<8x128xf32> to vector<8xf32>
    %92 = vector.shape_cast %91 : vector<8xf32> to vector<8x1xf32>
    %93 = math.log %92 : vector<8x1xf32>
    %94 = vector.broadcast %93 : vector<8x1xf32> to vector<8x128xf32>
    %95 = arith.subf %89, %94 : vector<8x128xf32>
    %96 = arith.addf %55, %95 : vector<8x128xf32>
    %c2_30 = arith.constant 2 : index
    %c0_31 = arith.constant 0 : index
    %c0_32 = arith.constant 0 : index
    %97 = vector.load %arg3[%c2_30, %c0_31, %c0_32] : memref<4x8x128xf32, #tpu.memory_space<vmem>>, vector<1x8x128xf32>
    %98 = vector.shape_cast %97 : vector<1x8x128xf32> to vector<8x128xf32>
    %cst_33 = arith.constant dense<0.000000e+00> : vector<128xf32>
    %99 = vector.multi_reduction <add>, %98, %cst_33 [0] : vector<8x128xf32> to vector<128xf32>
    %100 = vector.shape_cast %99 : vector<128xf32> to vector<1x128xf32>
    %101 = arith.addf %60, %100 : vector<1x128xf32>
    %102 = vector.broadcast %2 : vector<1x128xf32> to vector<8x128xf32>
    %103 = arith.subf %98, %102 : vector<8x128xf32>
    %104 = vector.broadcast %1 : f32 to vector<8x128xf32>
    %105 = arith.mulf %103, %104 : vector<8x128xf32>
    %cst_34 = arith.constant dense<0xFF800000> : vector<8xf32>
    %106 = vector.multi_reduction <maximumf>, %105, %cst_34 [1] : vector<8x128xf32> to vector<8xf32>
    %107 = vector.shape_cast %106 : vector<8xf32> to vector<8x1xf32>
    %108 = vector.broadcast %107 : vector<8x1xf32> to vector<8x128xf32>
    %109 = arith.subf %105, %108 : vector<8x128xf32>
    %110 = math.exp %109 : vector<8x128xf32>
    %cst_35 = arith.constant dense<0.000000e+00> : vector<8xf32>
    %111 = vector.multi_reduction <add>, %110, %cst_35 [1] : vector<8x128xf32> to vector<8xf32>
    %112 = vector.shape_cast %111 : vector<8xf32> to vector<8x1xf32>
    %113 = tpu.reciprocal %112 {approx = true} : vector<8x1xf32> -> vector<8x1xf32>
    %114 = vector.broadcast %113 : vector<8x1xf32> to vector<8x128xf32>
    %115 = arith.mulf %110, %114 : vector<8x128xf32>
    %116 = arith.addf %75, %115 : vector<8x128xf32>
    %117 = arith.mulf %115, %95 : vector<8x128xf32>
    %118 = vector.shape_cast %117 : vector<8x128xf32> to vector<1x8x128xf32>
    %cst_36 = arith.constant dense<0.000000e+00> : vector<1xf32>
    %119 = vector.multi_reduction <add>, %118, %cst_36 [1, 2] : vector<1x8x128xf32> to vector<1xf32>
    %120 = vector.shape_cast %119 : vector<1xf32> to vector<1x1x1xf32>
    %121 = vector.extract %120[0, 0, 0] : f32 from vector<1x1x1xf32>
    %122 = arith.addf %81, %121 : f32
    %c3 = arith.constant 3 : index
    %c0_37 = arith.constant 0 : index
    %c0_38 = arith.constant 0 : index
    %123 = vector.load %arg2[%c3, %c0_37, %c0_38] : memref<4x8x128xf32, #tpu.memory_space<vmem>>, vector<1x8x128xf32>
    %124 = vector.shape_cast %123 : vector<1x8x128xf32> to vector<8x128xf32>
    %125 = vector.broadcast %0 : f32 to vector<8x128xf32>
    %126 = arith.mulf %124, %125 : vector<8x128xf32>
    %cst_39 = arith.constant dense<0xFF800000> : vector<8xf32>
    %127 = vector.multi_reduction <maximumf>, %126, %cst_39 [1] : vector<8x128xf32> to vector<8xf32>
    %128 = vector.shape_cast %127 : vector<8xf32> to vector<8x1xf32>
    %129 = vector.broadcast %128 : vector<8x1xf32> to vector<8x128xf32>
    %130 = arith.subf %126, %129 : vector<8x128xf32>
    %131 = math.exp %130 : vector<8x128xf32>
    %cst_40 = arith.constant dense<0.000000e+00> : vector<8xf32>
    %132 = vector.multi_reduction <add>, %131, %cst_40 [1] : vector<8x128xf32> to vector<8xf32>
    %133 = vector.shape_cast %132 : vector<8xf32> to vector<8x1xf32>
    %134 = math.log %133 : vector<8x1xf32>
    %135 = vector.broadcast %134 : vector<8x1xf32> to vector<8x128xf32>
    %136 = arith.subf %130, %135 : vector<8x128xf32>
    %137 = arith.addf %96, %136 : vector<8x128xf32>
    %c3_41 = arith.constant 3 : index
    %c0_42 = arith.constant 0 : index
    %c0_43 = arith.constant 0 : index
    %138 = vector.load %arg3[%c3_41, %c0_42, %c0_43] : memref<4x8x128xf32, #tpu.memory_space<vmem>>, vector<1x8x128xf32>
    %139 = vector.shape_cast %138 : vector<1x8x128xf32> to vector<8x128xf32>
    %cst_44 = arith.constant dense<0.000000e+00> : vector<128xf32>
    %140 = vector.multi_reduction <add>, %139, %cst_44 [0] : vector<8x128xf32> to vector<128xf32>
    %141 = vector.shape_cast %140 : vector<128xf32> to vector<1x128xf32>
    %142 = arith.addf %101, %141 : vector<1x128xf32>
    %143 = vector.broadcast %2 : vector<1x128xf32> to vector<8x128xf32>
    %144 = arith.subf %139, %143 : vector<8x128xf32>
    %145 = vector.broadcast %1 : f32 to vector<8x128xf32>
    %146 = arith.mulf %144, %145 : vector<8x128xf32>
    %cst_45 = arith.constant dense<0xFF800000> : vector<8xf32>
    %147 = vector.multi_reduction <maximumf>, %146, %cst_45 [1] : vector<8x128xf32> to vector<8xf32>
    %148 = vector.shape_cast %147 : vector<8xf32> to vector<8x1xf32>
    %149 = vector.broadcast %148 : vector<8x1xf32> to vector<8x128xf32>
    %150 = arith.subf %146, %149 : vector<8x128xf32>
    %151 = math.exp %150 : vector<8x128xf32>
    %cst_46 = arith.constant dense<0.000000e+00> : vector<8xf32>
    %152 = vector.multi_reduction <add>, %151, %cst_46 [1] : vector<8x128xf32> to vector<8xf32>
    %153 = vector.shape_cast %152 : vector<8xf32> to vector<8x1xf32>
    %154 = tpu.reciprocal %153 {approx = true} : vector<8x1xf32> -> vector<8x1xf32>
    %155 = vector.broadcast %154 : vector<8x1xf32> to vector<8x128xf32>
    %156 = arith.mulf %151, %155 : vector<8x128xf32>
    %157 = arith.addf %116, %156 : vector<8x128xf32>
    %158 = arith.mulf %156, %136 : vector<8x128xf32>
    %159 = vector.shape_cast %158 : vector<8x128xf32> to vector<1x8x128xf32>
    %cst_47 = arith.constant dense<0.000000e+00> : vector<1xf32>
    %160 = vector.multi_reduction <add>, %159, %cst_47 [1, 2] : vector<1x8x128xf32> to vector<1xf32>
    %161 = vector.shape_cast %160 : vector<1xf32> to vector<1x1x1xf32>
    %162 = vector.extract %161[0, 0, 0] : f32 from vector<1x1x1xf32>
    %163 = arith.addf %122, %162 : f32
    %164 = arith.mulf %157, %137 : vector<8x128xf32>
    %165 = vector.shape_cast %164 : vector<8x128xf32> to vector<1x8x128xf32>
    %cst_48 = arith.constant dense<0.000000e+00> : vector<1xf32>
    %166 = vector.multi_reduction <add>, %165, %cst_48 [1, 2] : vector<1x8x128xf32> to vector<1xf32>
    %167 = vector.shape_cast %166 : vector<1xf32> to vector<1x1x1xf32>
    %168 = vector.extract %167[0, 0, 0] : f32 from vector<1x1x1xf32>
    %169 = arith.subf %163, %168 : f32
    %cst_49 = arith.constant 6.250000e-02 : f32
    %170 = arith.mulf %169, %cst_49 : f32
    %171 = vector.broadcast %170 : f32 to vector<1x1x128xf32>
    %c0_50 = arith.constant 0 : index
    %c0_51 = arith.constant 0 : index
    %c0_52 = arith.constant 0 : index
    %172 = vector.load %arg5[%c0_50, %c0_51, %c0_52] : memref<1x1x128xf32, #tpu.memory_space<vmem>>, vector<1x1x128xf32>
    tpu.vector_store %arg5[%c0_50, %c0_51, %c0_52], %171 {strides = array<i32>} : memref<1x1x128xf32, #tpu.memory_space<vmem>>, vector<1x1x128xf32>,
    %173 = vector.shape_cast %142 : vector<1x128xf32> to vector<1x1x128xf32>
    %c0_53 = arith.constant 0 : index
    %c0_54 = arith.constant 0 : index
    %c0_55 = arith.constant 0 : index
    %174 = vector.load %arg6[%c0_53, %c0_54, %c0_55] : memref<1x1x128xf32, #tpu.memory_space<vmem>>, vector<1x1x128xf32>
    tpu.vector_store %arg6[%c0_53, %c0_54, %c0_55], %173 {strides = array<i32>} : memref<1x1x128xf32, #tpu.memory_space<vmem>>, vector<1x1x128xf32>,
    return
  }
  func.func @transform_0(%arg0: i32) -> i32 {
    %c0_i32 = arith.constant 0 : i32
    %c0_i32_0 = arith.constant 0 : i32
    return %c0_i32 : i32
  }
  func.func @transform_1(%arg0: i32) -> (i32, i32, i32) {
    %c0_i32 = arith.constant 0 : i32
    %c0_i32_0 = arith.constant 0 : i32
    %c0_i32_1 = arith.constant 0 : i32
    return %c0_i32, %arg0, %c0_i32_0 : i32, i32, i32
  }
  func.func @transform_2(%arg0: i32) -> (i32, i32, i32) {
    %c0_i32 = arith.constant 0 : i32
    %c0_i32_0 = arith.constant 0 : i32
    %c0_i32_1 = arith.constant 0 : i32
    return %c0_i32, %arg0, %c0_i32_0 : i32, i32, i32
  }
  func.func @transform_3(%arg0: i32) -> (i32, i32) {
    %c0_i32 = arith.constant 0 : i32
    %c0_i32_0 = arith.constant 0 : i32
    %c0_i32_1 = arith.constant 0 : i32
    return %c0_i32, %c0_i32_0 : i32, i32
  }
  func.func @transform_4(%arg0: i32) -> (i32, i32, i32) {
    %c0_i32 = arith.constant 0 : i32
    %c0_i32_0 = arith.constant 0 : i32
    %c0_i32_1 = arith.constant 0 : i32
    return %arg0, %c0_i32, %c0_i32_0 : i32, i32, i32
  }
  func.func @transform_5(%arg0: i32) -> (i32, i32, i32) {
    %c0_i32 = arith.constant 0 : i32
    %c0_i32_0 = arith.constant 0 : i32
    %c0_i32_1 = arith.constant 0 : i32
    return %arg0, %c0_i32, %c0_i32_0 : i32, i32, i32
  }
}

</mosaic_0001>

<llo_original>
// kernel: _loss_atal_forward.1
$region0: #{_loss_atal_forward.1}
  #allocation0 [shape = 'u32[]', space=smem, size = 0x4, offset = 0x4, fixed_abs, tag = 'smem constant byte address 0x4 - core index']
  #allocation1 [shape = 'u32[144,128]{1,0:T(1,128)}', space=vmem, size = 0x12000, scoped, tag = 'internal scratch']
  %s0 = inlined_call_operand.vmem [shape: f32[2], index: 0, kind: input, shape index: {}]
  %s1 = inlined_call_operand.hbm [shape: f32[4,16,128], index: 1, kind: input, shape index: {}]
  %s2 = inlined_call_operand.hbm [shape: f32[4,16,128], index: 2, kind: input, shape index: {}]
  %s3 = inlined_call_operand.vmem [shape: f32[1,128], index: 3, kind: input, shape index: {}]
  %s4 = inlined_call_operand.vmem [shape: f32[2,1,128], index: 4, kind: output, shape index: {0}]
  %s5 = inlined_call_operand.vmem [shape: f32[2,1,128], index: 5, kind: output, shape index: {1}]
  %6 = xla_tuple %s4, %s5
  %s7 = sld [smem:[#allocation0]]
  $region69: #{_loss_atal_forward.1} parent=0
    _
  %s9 = ssub.s32 1, %s7
  %s10 = scalar_select 0, %s9, %s7
  $region1: #{_loss_atal_forward.1} parent=0
    #allocation2 [shape = 'u8[512]{0}', space=smem, size = 0x200, scoped, tag = 'input window, operand 0, single buffered']
    #allocation3 [shape = 's32[2]{0}', space=sflag, size = 0x8, scoped, tag = 'scoped memory for _loss_atal_forward.1']
    #allocation4 [shape = 's32[2]{0}', space=sflag, size = 0x8, scoped, tag = 'scoped memory for _loss_atal_forward.1']
    #allocation5 [shape = 'u8[32768]{0}', space=vmem, size = 0x8000, scoped, tag = 'input window, operand 1']
    #allocation6 [shape = 'u8[32768]{0}', space=vmem, size = 0x8000, scoped, tag = 'input window, operand 2']
    #allocation7 [shape = 's32[2]{0}', space=sflag, size = 0x8, scoped, tag = 'scoped memory for _loss_atal_forward.1']
    %11 = vsyncpa [#allocation4], 0
    %12 = vsyncpa [#allocation3], 0
    %s13 = scalar_lea.sflag [#allocation3], 1
    %14 = vsyncpa %s13, 0
    %15 = vsyncpa [#allocation7], 0
    %s16 = scalar_lea.sflag [#allocation7], 1
    %17 = vsyncpa %s16, 0
    loop: start=0, step=1, limit=4
    $region2: #{_loss_atal_forward.1} parent=1 // loop_pre_header
      _
    $region3: #{_loss_atal_forward.1} parent=1 // loop_header
      %s19 = sphi 0, %s23
      %p20 = scmp.ge.s32.totalorder %s19, 4
      %s27 = sphi 0, %s27
      %s29 = sphi 0, %s27
      %s30 = sphi 0, %s29
      %s44 = sphi 0, %s30
      %s50 = sphi 0, %s52
      %s53 = sphi 0, %s50
      %s54 = sphi 0, %s53
      %s70 = sphi 0, %s54
      %s76 = sphi 0, %s78
      %s79 = sphi 0, %s76
      %s80 = sphi 0, %s79
      %s96 = sphi 0, %s80
      %s100 = sphi 0, %s100
      %s102 = sphi 0, %s100
      %s103 = sphi 0, %s102
      %s117 = sphi 0, %s103
      %s123 = sphi 0, %s125
      %s126 = sphi 0, %s123
      %s127 = sphi 0, %s126
      %s143 = sphi 0, %s127
      %s149 = sphi 0, %s151
      %s152 = sphi 0, %s149
      %s153 = sphi 0, %s152
      %s169 = sphi 0, %s153
    $region4: #{_loss_atal_forward.1} parent=1 // loop_header_branch
      %22 = sbr.rel (%p20) target = $region8
    $region5: #{_loss_atal_forward.1} parent=1 // loop_body
      %s24 = ssub.s32 %s19, 1
      %s25 = ssub.s32 %s19, 2
      %s26 = sadd.s32 %s19, 1
      %s28 = sadd.s32 %s27, 1
      %p31 = scmp.eq.s32.totalorder %s19, 1
      %p32 = scmp.ne.s32.totalorder %s27, %s29
      %p33 = scmp.eq.s32.totalorder %s19, 0
      %p34 = por %p32, %p33
      %p35 = scmp.ne.s32.totalorder %s27, %s29
      %p36 = scmp.eq.s32.totalorder %s24, 1
      %p37 = por %p35, %p36
      %p38 = scmp.ne.s32.totalorder %s29, %s30
      %p39 = scmp.eq.s32.totalorder %s24, 0
      %p40 = por %p38, %p39
      %p41 = scmp.ne.s32.totalorder %s29, %s30
      %p42 = scmp.eq.s32.totalorder %s25, 1
      %p43 = por %p41, %p42
      %p45 = scmp.ne.s32.totalorder %s30, %s44
      %p46 = scmp.eq.s32.totalorder %s25, 0
      %p47 = por %p45, %p46
      %s48 = ssub.s32 %s19, %s26
      %p49 = scmp.eq.s32.totalorder %s48, 0
      %s51 = sadd.s32 %s50, 1
      %s52 = scalar_select %p49, %s50, %s51
      %p55 = pneg %p49
      %p56 = scmp.eq.s32.totalorder %s19, 1
      %p57 = por %p55, %p56
      %p58 = scmp.ne.s32.totalorder %s50, %s53
      %p59 = scmp.eq.s32.totalorder %s19, 0
      %p60 = por %p58, %p59
      %p61 = scmp.ne.s32.totalorder %s50, %s53
      %p62 = scmp.eq.s32.totalorder %s24, 1
      %p63 = por %p61, %p62
      %p64 = scmp.ne.s32.totalorder %s53, %s54
      %p65 = scmp.eq.s32.totalorder %s24, 0
      %p66 = por %p64, %p65
      %p67 = scmp.ne.s32.totalorder %s53, %s54
      %p68 = scmp.eq.s32.totalorder %s25, 1
      %p69 = por %p67, %p68
      %p71 = scmp.ne.s32.totalorder %s54, %s70
      %p72 = scmp.eq.s32.totalorder %s25, 0
      %p73 = por %p71, %p72
      %s74 = ssub.s32 %s19, %s26
      %p75 = scmp.eq.s32.totalorder %s74, 0
      %s77 = sadd.s32 %s76, 1
      %s78 = scalar_select %p75, %s76, %s77
      %p81 = pneg %p75
      %p82 = scmp.eq.s32.totalorder %s19, 1
      %p83 = por %p81, %p82
      %p84 = scmp.ne.s32.totalorder %s76, %s79
      %p85 = scmp.eq.s32.totalorder %s19, 0
      %p86 = por %p84, %p85
      %p87 = scmp.ne.s32.totalorder %s76, %s79
      %p88 = scmp.eq.s32.totalorder %s24, 1
      %p89 = por %p87, %p88
      %p90 = scmp.ne.s32.totalorder %s79, %s80
      %p91 = scmp.eq.s32.totalorder %s24, 0
      %p92 = por %p90, %p91
      %p93 = scmp.ne.s32.totalorder %s79, %s80
      %p94 = scmp.eq.s32.totalorder %s25, 1
      %p95 = por %p93, %p94
      %p97 = scmp.ne.s32.totalorder %s80, %s96
      %p98 = scmp.eq.s32.totalorder %s25, 0
      %p99 = por %p97, %p98
      %s101 = sadd.s32 %s100, 1
      %p104 = scmp.eq.s32.totalorder %s19, 1
      %p105 = scmp.ne.s32.totalorder %s100, %s102
      %p106 = scmp.eq.s32.totalorder %s19, 0
      %p107 = por %p105, %p106
      %p108 = scmp.ne.s32.totalorder %s100, %s102
      %p109 = scmp.eq.s32.totalorder %s24, 1
      %p110 = por %p108, %p109
      %p111 = scmp.ne.s32.totalorder %s102, %s103
      %p112 = scmp.eq.s32.totalorder %s24, 0
      %p113 = por %p111, %p112
      %p114 = scmp.ne.s32.totalorder %s102, %s103
      %p115 = scmp.eq.s32.totalorder %s25, 1
      %p116 = por %p114, %p115
      %p118 = scmp.ne.s32.totalorder %s103, %s117
      %p119 = scmp.eq.s32.totalorder %s25, 0
      %p120 = por %p118, %p119
      %s121 = ssub.s32 %s19, %s26
      %p122 = scmp.eq.s32.totalorder %s121, 0
      %s124 = sadd.s32 %s123, 1
      %s125 = scalar_select %p122, %s123, %s124
      %p128 = pneg %p122
      %p129 = scmp.eq.s32.totalorder %s19, 1
      %p130 = por %p128, %p129
      %p131 = scmp.ne.s32.totalorder %s123, %s126
      %p132 = scmp.eq.s32.totalorder %s19, 0
      %p133 = por %p131, %p132
      %p134 = scmp.ne.s32.totalorder %s123, %s126
      %p135 = scmp.eq.s32.totalorder %s24, 1
      %p136 = por %p134, %p135
      %p137 = scmp.ne.s32.totalorder %s126, %s127
      %p138 = scmp.eq.s32.totalorder %s24, 0
      %p139 = por %p137, %p138
      %p140 = scmp.ne.s32.totalorder %s126, %s127
      %p141 = scmp.eq.s32.totalorder %s25, 1
      %p142 = por %p140, %p141
      %p144 = scmp.ne.s32.totalorder %s127, %s143
      %p145 = scmp.eq.s32.totalorder %s25, 0
      %p146 = por %p144, %p145
      %s147 = ssub.s32 %s19, %s26
      %p148 = scmp.eq.s32.totalorder %s147, 0
      %s150 = sadd.s32 %s149, 1
      %s151 = scalar_select %p148, %s149, %s150
      %p154 = pneg %p148
      %p155 = scmp.eq.s32.totalorder %s19, 1
      %p156 = por %p154, %p155
      %p157 = scmp.ne.s32.totalorder %s149, %s152
      %p158 = scmp.eq.s32.totalorder %s19, 0
      %p159 = por %p157, %p158
      %p160 = scmp.ne.s32.totalorder %s149, %s152
      %p161 = scmp.eq.s32.totalorder %s24, 1
      %p162 = por %p160, %p161
      %p163 = scmp.ne.s32.totalorder %s152, %s153
      %p164 = scmp.eq.s32.totalorder %s24, 0
      %p165 = por %p163, %p164
      %p166 = scmp.ne.s32.totalorder %s152, %s153
      %p167 = scmp.eq.s32.totalorder %s25, 1
      %p168 = por %p166, %p167
      %p170 = scmp.ne.s32.totalorder %s153, %s169
      %p171 = scmp.eq.s32.totalorder %s25, 0
      %p172 = por %p170, %p171
      %p173 = scmp.le.s32.totalorder 1, %s19
      %p174 = scmp.lt.s32.totalorder %s19, 3
      %p175 = pnand %p173, %p174
      %p176 = pneg %p175
      // Predicated region
      $region9: #{_loss_atal_forward.1} parent=5 // pred_check
        _
      $region10: #{_loss_atal_forward.1} parent=5 // pred_check_branch
        %178 = sbr.rel (%p175) target = $region12
      $region11: #{_loss_atal_forward.1} parent=5 // pred_region
        %s179 = ssub.s32 %s19, 1
        // Predicated region
        $region13: #{_loss_atal_forward.1} parent=11 // pred_check
          %p180 = pneg %p40
        $region14: #{_loss_atal_forward.1} parent=11 // pred_check_branch
          %182 = sbr.rel (%p180) target = $region16
        $region15: #{_loss_atal_forward.1} parent=11 // pred_region
          %s184 = ssub.s32 16, 16
          %185 = vsyncadd [#allocation4], %s184
          %s187 = sshll.u32 %s0, 4
          %s188 = int_to_ptr.vmem [resolvable:$true] %s187
          %190 = dma.vmem_to_smem %s188, 16, [#allocation2], [#allocation4]
        $region16: #{_loss_atal_forward.1} parent=11 // pred_fallthru
          _
        // Predicated region
        $region17: #{_loss_atal_forward.1} parent=11 // pred_check
          %p191 = pneg %p113
        $region18: #{_loss_atal_forward.1} parent=11 // pred_check_branch
          %193 = sbr.rel (%p191) target = $region20
        $region19: #{_loss_atal_forward.1} parent=11 // pred_region
          _
        $region20: #{_loss_atal_forward.1} parent=11 // pred_fallthru
          _
      $region12: #{_loss_atal_forward.1} parent=5 // pred_fallthru
        _
      %p194 = scmp.lt.s32.totalorder %s19, 2
      // Predicated region
      $region21: #{_loss_atal_forward.1} parent=5 // pred_check
        %p195 = pneg %p194
      $region22: #{_loss_atal_forward.1} parent=5 // pred_check_branch
        %197 = sbr.rel (%p195) target = $region24
      $region23: #{_loss_atal_forward.1} parent=5 // pred_region
        // Predicated region
        $region25: #{_loss_atal_forward.1} parent=23 // pred_check
          %p198 = pneg %p60
        $region26: #{_loss_atal_forward.1} parent=23 // pred_check_branch
          %200 = sbr.rel (%p198) target = $region28
        $region27: #{_loss_atal_forward.1} parent=23 // pred_region
          %s201 = sand.u32 %s50, 1
          %s202 = scalar_lea.sflag [#allocation3], %s201
          %s203 = sand.u32 %s50, 1
          %s204 = smul.addr %s203, 32
          %s205 = scalar_lea.vmem [#allocation5], %s204
          %s207 = ssub.s32 512, 512
          %208 = vsyncadd %s202, %s207
          %s209 = smul.addr %s19, 128
          %s210 = scalar_lea.hbm %s1, %s209
          %s211 = sshll.u32 %s205, 4
          %s212 = int_to_ptr.vmem [resolvable:$true] %s211
          %217 = dma.hbm_to_vmem [thread:$0]  %s210, 512, %s212, %s202, 256, 128, 8
        $region28: #{_loss_atal_forward.1} parent=23 // pred_fallthru
          _
        // Predicated region
        $region29: #{_loss_atal_forward.1} parent=23 // pred_check
          %p218 = pneg %p86
        $region30: #{_loss_atal_forward.1} parent=23 // pred_check_branch
          %220 = sbr.rel (%p218) target = $region32
        $region31: #{_loss_atal_forward.1} parent=23 // pred_region
          %s221 = sand.u32 %s76, 1
          %s222 = scalar_lea.sflag [#allocation7], %s221
          %s223 = sand.u32 %s76, 1
          %s224 = smul.addr %s223, 32
          %s225 = scalar_lea.vmem [#allocation6], %s224
          %s227 = ssub.s32 512, 512
          %228 = vsyncadd %s222, %s227
          %s229 = smul.addr %s19, 128
          %s230 = scalar_lea.hbm %s2, %s229
          %s231 = sshll.u32 %s225, 4
          %s232 = int_to_ptr.vmem [resolvable:$true] %s231
          %237 = dma.hbm_to_vmem [thread:$0]  %s230, 512, %s232, %s222, 256, 128, 8
        $region32: #{_loss_atal_forward.1} parent=23 // pred_fallthru
          _
      $region24: #{_loss_atal_forward.1} parent=5 // pred_fallthru
        _
      %p238 = scmp.le.s32.totalorder 1, %s19
      %p239 = scmp.lt.s32.totalorder %s19, 3
      %p240 = pnand %p238, %p239
      %p241 = pneg %p240
      // Predicated region
      $region33: #{_loss_atal_forward.1} parent=5 // pred_check
        _
      $region34: #{_loss_atal_forward.1} parent=5 // pred_check_branch
        %243 = sbr.rel (%p240) target = $region36
      $region35: #{_loss_atal_forward.1} parent=5 // pred_region
        %s244 = ssub.s32 %s19, 1
        // Predicated region
        $region37: #{_loss_atal_forward.1} parent=35 // pred_check
          %p245 = pneg %p40
        $region38: #{_loss_atal_forward.1} parent=35 // pred_check_branch
          %247 = sbr.rel (%p245) target = $region40
        $region39: #{_loss_atal_forward.1} parent=35 // pred_region
          %248 = dma.done [#allocation4], 16
        $region40: #{_loss_atal_forward.1} parent=35 // pred_fallthru
          _
        %s249 = sand.u32 %s53, 1
        %s250 = scalar_lea.sflag [#allocation3], %s249
        %s251 = sand.u32 %s53, 1
        %s252 = smul.addr %s251, 32
        %s253 = scalar_lea.vmem [#allocation5], %s252
        // Predicated region
        $region41: #{_loss_atal_forward.1} parent=35 // pred_check
          %p254 = pneg %p66
        $region42: #{_loss_atal_forward.1} parent=35 // pred_check_branch
          %256 = sbr.rel (%p254) target = $region44
        $region43: #{_loss_atal_forward.1} parent=35 // pred_region
          %257 = dma.done %s250, 512
        $region44: #{_loss_atal_forward.1} parent=35 // pred_fallthru
          _
        %s258 = sand.u32 %s79, 1
        %s259 = scalar_lea.sflag [#allocation7], %s258
        %s260 = sand.u32 %s79, 1
        %s261 = smul.addr %s260, 32
        %s262 = scalar_lea.vmem [#allocation6], %s261
        // Predicated region
        $region45: #{_loss_atal_forward.1} parent=35 // pred_check
          %p263 = pneg %p92
        $region46: #{_loss_atal_forward.1} parent=35 // pred_check_branch
          %265 = sbr.rel (%p263) target = $region48
        $region47: #{_loss_atal_forward.1} parent=35 // pred_region
          %266 = dma.done %s259, 512
        $region48: #{_loss_atal_forward.1} parent=35 // pred_fallthru
          _
        %267 = sfence
        %p268 = pneg %p40
        %p269 = pneg %p37
        %s270 = sand.u32 %s53, 1
        %s271 = scalar_lea.sflag [#allocation3], %s270
        %s272 = sand.u32 %s53, 1
        %s273 = smul.addr %s272, 32
        %s274 = scalar_lea.vmem [#allocation5], %s273
        %p275 = pneg %p66
        %p276 = pneg %p63
        %s277 = sand.u32 %s79, 1
        %s278 = scalar_lea.sflag [#allocation7], %s277
        %s279 = sand.u32 %s79, 1
        %s280 = smul.addr %s279, 32
        %s281 = scalar_lea.vmem [#allocation6], %s280
        %p282 = pneg %p92
        %p283 = pneg %p89
        %p284 = pneg %p113
        %p285 = pneg %p110
        %p286 = pneg %p139
        %p287 = pneg %p136
        %p288 = scmp.lt.s32.totalorder %s24, 1
        %s289 = scalar_select %p288, %s24, 1
        %s290 = scalar_lea.vmem %s4, %s289
        %p291 = pneg %p165
        %p292 = pneg %p162
        %p293 = scmp.lt.s32.totalorder %s24, 1
        %s294 = scalar_select %p293, %s24, 1
        %s295 = scalar_lea.vmem %s5, %s294
        %p296 = scmp.lt.s32.totalorder %s24, 1
        %s297 = scalar_select %p296, %s24, 1
        %s298 = scalar_lea.vmem %s4, %s297
        %p299 = scmp.lt.s32.totalorder %s24, 1
        %s300 = scalar_select %p299, %s24, 1
        %s301 = scalar_lea.vmem %s5, %s300
        %s302 = sld [smem:[#allocation2]]
        %s303 = sld [smem:[#allocation2 + $0x1]]
        %v304 = vld [vmem:[%s3] sm:$0x1]
        %v305 = vld [vmem:[%s253] sm:$0xff]
        %v306 = vstv %s302
        %v307 = vmul.f32 %v305, %v306
        %308 = vmax.xlane.f32.xlu0 %v307
        %v309 = vpop.xlane.xlu0 %308
        %v310 = vsub.f32 %v307, %v309
        %v311 = vmul.f32 %v310, 1.442695
        %v312 = vpow.pop %v311
        %313 = vadd.xlane.f32.xlu0 %v312
        %v314 = vpop.xlane.xlu0 %313
        %v315 = vlog2.pop %v314
        %v316 = vmul.f32 %v315, 0.6931472
        %v317 = vsub.f32 %v310, %v316
        %v318 = vld [vmem:[%s262] sm:$0xff]
        %v319 = vrot.slane %v318, 4
        %v320 = vadd.f32 %v318, %v319
        %v321 = vrot.slane %v320, 2
        %v322 = vadd.f32 %v320, %v321
        %v323 = vrot.slane %v322, 1
        %v324 = vadd.f32 %v322, %v323
        %v326 = vlaneseq
        %v327 = vshrl.u32 %v326, 7
        %v328 = vsub.s32 0, %v327
        %v329 = vrot.slane %v304, %v328
        %v331 = vsub.f32 %v318, %v329
        %v332 = vstv %s303
        %v333 = vmul.f32 %v331, %v332
        %334 = vmax.xlane.f32.xlu0 %v333
        %v335 = vpop.xlane.xlu0 %334
        %v336 = vsub.f32 %v333, %v335
        %v337 = vmul.f32 %v336, 1.442695
        %v338 = vpow.pop %v337
        %339 = vadd.xlane.f32.xlu0 %v338
        %v340 = vpop.xlane.xlu0 %339
        %v341 = vrcp.pop %v340
        %v342 = vmul.f32 %v338, %v341
        %v343 = vmul.f32 %v342, %v317
        %344 = vadd.xlane.f32.xlu0 %v343
        %v345 = vpop.xlane.xlu0 %344
        %v346 = vrot.slane %v345, 4
        %v347 = vadd.f32 %v345, %v346
        %v348 = vrot.slane %v347, 2
        %v349 = vadd.f32 %v347, %v348
        %v350 = vrot.slane %v349, 1
        %v351 = vadd.f32 %v349, %v350
        %s352 = vtos %v351
        %s353 = sadd.f32 %s352, 0.0
        %s354 = scalar_lea.vmem %s253, 8 [#allocation5]
        %v355 = vld [vmem:[%s354] sm:$0xff]
        %v356 = vmul.f32 %v355, %v306
        %357 = vmax.xlane.f32.xlu0 %v356
        %v358 = vpop.xlane.xlu0 %357
        %v359 = vsub.f32 %v356, %v358
        %v360 = vmul.f32 %v359, 1.442695
        %v361 = vpow.pop %v360
        %362 = vadd.xlane.f32.xlu0 %v361
        %v363 = vpop.xlane.xlu0 %362
        %v364 = vlog2.pop %v363
        %v365 = vmul.f32 %v364, 0.6931472
        %v366 = vsub.f32 %v359, %v365
        %v367 = vadd.f32 %v317, %v366
        %s368 = scalar_lea.vmem %s262, 8 [#allocation6]
        %v369 = vld [vmem:[%s368] sm:$0xff]
        %v370 = vrot.slane %v369, 4
        %v371 = vadd.f32 %v369, %v370
        %v372 = vrot.slane %v371, 2
        %v373 = vadd.f32 %v371, %v372
        %v374 = vrot.slane %v373, 1
        %v375 = vadd.f32 %v373, %v374
        %v376 = vadd.f32 %v324, %v375
        %v377 = vsub.f32 %v369, %v329
        %v378 = vmul.f32 %v377, %v332
        %379 = vmax.xlane.f32.xlu0 %v378
        %v380 = vpop.xlane.xlu0 %379
        %v381 = vsub.f32 %v378, %v380
        %v382 = vmul.f32 %v381, 1.442695
        %v383 = vpow.pop %v382
        %384 = vadd.xlane.f32.xlu0 %v383
        %v385 = vpop.xlane.xlu0 %384
        %v386 = vrcp.pop %v385
        %v387 = vmul.f32 %v383, %v386
        %v388 = vadd.f32 %v342, %v387
        %v389 = vmul.f32 %v387, %v366
        %390 = vadd.xlane.f32.xlu0 %v389
        %v391 = vpop.xlane.xlu0 %390
        %v392 = vrot.slane %v391, 4
        %v393 = vadd.f32 %v391, %v392
        %v394 = vrot.slane %v393, 2
        %v395 = vadd.f32 %v393, %v394
        %v396 = vrot.slane %v395, 1
        %v397 = vadd.f32 %v395, %v396
        %s398 = vtos %v397
        %s399 = sadd.f32 %s353, %s398
        %s400 = scalar_lea.vmem %s253, 16 [#allocation5]
        %v401 = vld [vmem:[%s400] sm:$0xff]
        %v402 = vmul.f32 %v401, %v306
        %403 = vmax.xlane.f32.xlu0 %v402
        %v404 = vpop.xlane.xlu0 %403
        %v405 = vsub.f32 %v402, %v404
        %v406 = vmul.f32 %v405, 1.442695
        %v407 = vpow.pop %v406
        %408 = vadd.xlane.f32.xlu0 %v407
        %v409 = vpop.xlane.xlu0 %408
        %v410 = vlog2.pop %v409
        %v411 = vmul.f32 %v410, 0.6931472
        %v412 = vsub.f32 %v405, %v411
        %v413 = vadd.f32 %v367, %v412
        %s414 = scalar_lea.vmem %s262, 16 [#allocation6]
        %v415 = vld [vmem:[%s414] sm:$0xff]
        %v416 = vrot.slane %v415, 4
        %v417 = vadd.f32 %v415, %v416
        %v418 = vrot.slane %v417, 2
        %v419 = vadd.f32 %v417, %v418
        %v420 = vrot.slane %v419, 1
        %v421 = vadd.f32 %v419, %v420
        %v422 = vadd.f32 %v376, %v421
        %v423 = vsub.f32 %v415, %v329
        %v424 = vmul.f32 %v423, %v332
        %425 = vmax.xlane.f32.xlu0 %v424
        %v426 = vpop.xlane.xlu0 %425
        %v427 = vsub.f32 %v424, %v426
        %v428 = vmul.f32 %v427, 1.442695
        %v429 = vpow.pop %v428
        %430 = vadd.xlane.f32.xlu0 %v429
        %v431 = vpop.xlane.xlu0 %430
        %v432 = vrcp.pop %v431
        %v433 = vmul.f32 %v429, %v432
        %v434 = vadd.f32 %v388, %v433
        %v435 = vmul.f32 %v433, %v412
        %436 = vadd.xlane.f32.xlu0 %v435
        %v437 = vpop.xlane.xlu0 %436
        %v438 = vrot.slane %v437, 4
        %v439 = vadd.f32 %v437, %v438
        %v440 = vrot.slane %v439, 2
        %v441 = vadd.f32 %v439, %v440
        %v442 = vrot.slane %v441, 1
        %v443 = vadd.f32 %v441, %v442
        %s444 = vtos %v443
        %s445 = sadd.f32 %s399, %s444
        %s446 = scalar_lea.vmem %s253, 24 [#allocation5]
        %v447 = vld [vmem:[%s446] sm:$0xff]
        %v448 = vmul.f32 %v447, %v306
        %449 = vmax.xlane.f32.xlu0 %v448
        %v450 = vpop.xlane.xlu0 %449
        %v451 = vsub.f32 %v448, %v450
        %v452 = vmul.f32 %v451, 1.442695
        %v453 = vpow.pop %v452
        %454 = vadd.xlane.f32.xlu0 %v453
        %v455 = vpop.xlane.xlu0 %454
        %v456 = vlog2.pop %v455
        %v457 = vmul.f32 %v456, 0.6931472
        %v458 = vsub.f32 %v451, %v457
        %v459 = vadd.f32 %v413, %v458
        %s460 = scalar_lea.vmem %s262, 24 [#allocation6]
        %v461 = vld [vmem:[%s460] sm:$0xff]
        %v462 = vrot.slane %v461, 4
        %v463 = vadd.f32 %v461, %v462
        %v464 = vrot.slane %v463, 2
        %v465 = vadd.f32 %v463, %v464
        %v466 = vrot.slane %v465, 1
        %v467 = vadd.f32 %v465, %v466
        %v468 = vadd.f32 %v422, %v467
        %v469 = vsub.f32 %v461, %v329
        %v470 = vmul.f32 %v469, %v332
        %471 = vmax.xlane.f32.xlu0 %v470
        %v472 = vpop.xlane.xlu0 %471
        %v473 = vsub.f32 %v470, %v472
        %v474 = vmul.f32 %v473, 1.442695
        %v475 = vpow.pop %v474
        %476 = vadd.xlane.f32.xlu0 %v475
        %v477 = vpop.xlane.xlu0 %476
        %v478 = vrcp.pop %v477
        %v479 = vmul.f32 %v475, %v478
        %v480 = vadd.f32 %v434, %v479
        %v481 = vmul.f32 %v479, %v458
        %482 = vadd.xlane.f32.xlu0 %v481
        %v483 = vpop.xlane.xlu0 %482
        %v484 = vrot.slane %v483, 4
        %v485 = vadd.f32 %v483, %v484
        %v486 = vrot.slane %v485, 2
        %v487 = vadd.f32 %v485, %v486
        %v488 = vrot.slane %v487, 1
        %v489 = vadd.f32 %v487, %v488
        %s490 = vtos %v489
        %s491 = sadd.f32 %s445, %s490
        %v492 = vmul.f32 %v480, %v459
        %493 = vadd.xlane.f32.xlu0 %v492
        %v494 = vpop.xlane.xlu0 %493
        %v495 = vrot.slane %v494, 4
        %v496 = vadd.f32 %v494, %v495
        %v497 = vrot.slane %v496, 2
        %v498 = vadd.f32 %v496, %v497
        %v499 = vrot.slane %v498, 1
        %v500 = vadd.f32 %v498, %v499
        %s501 = vtos %v500
        %s502 = ssub.f32 %s491, %s501
        %s503 = smul.f32 %s502, 0.0625
        %v504 = vstv %s503
        %505 = vst [vmem:[%s298] sm:$0x1] %v504
        %506 = vst [vmem:[%s301] sm:$0x1] %v468
        %p507 = scmp.lt.s32.totalorder %s24, 1
        %s508 = scalar_select %p507, %s24, 1
        %s509 = scalar_lea.vmem %s4, %s508
        %p510 = scmp.lt.s32.totalorder %s24, 1
        %s511 = scalar_select %p510, %s24, 1
        %s512 = scalar_lea.vmem %s5, %s511
        // Predicated region
        $region49: #{_loss_atal_forward.1} parent=35 // pred_check
          %p513 = pneg %p136
        $region50: #{_loss_atal_forward.1} parent=35 // pred_check_branch
          %515 = sbr.rel (%p513) target = $region52
        $region51: #{_loss_atal_forward.1} parent=35 // pred_region
          _
        $region52: #{_loss_atal_forward.1} parent=35 // pred_fallthru
          _
        // Predicated region
        $region53: #{_loss_atal_forward.1} parent=35 // pred_check
          %p516 = pneg %p162
        $region54: #{_loss_atal_forward.1} parent=35 // pred_check_branch
          %518 = sbr.rel (%p516) target = $region56
        $region55: #{_loss_atal_forward.1} parent=35 // pred_region
          _
        $region56: #{_loss_atal_forward.1} parent=35 // pred_fallthru
          _
      $region36: #{_loss_atal_forward.1} parent=5 // pred_fallthru
        _
      %p519 = scmp.le.s32.totalorder 2, %s19
      // Predicated region
      $region57: #{_loss_atal_forward.1} parent=5 // pred_check
        %p520 = pneg %p519
      $region58: #{_loss_atal_forward.1} parent=5 // pred_check_branch
        %522 = sbr.rel (%p520) target = $region60
      $region59: #{_loss_atal_forward.1} parent=5 // pred_region
        %s523 = ssub.s32 %s19, 2
        // Predicated region
        $region61: #{_loss_atal_forward.1} parent=59 // pred_check
          %p524 = pneg %p142
        $region62: #{_loss_atal_forward.1} parent=59 // pred_check_branch
          %526 = sbr.rel (%p524) target = $region64
        $region63: #{_loss_atal_forward.1} parent=59 // pred_region
          %p527 = scmp.lt.s32.totalorder %s25, 1
          %s528 = scalar_select %p527, %s25, 1
          %s529 = scalar_lea.vmem %s4, %s528
        $region64: #{_loss_atal_forward.1} parent=59 // pred_fallthru
          _
        // Predicated region
        $region65: #{_loss_atal_forward.1} parent=59 // pred_check
          %p530 = pneg %p168
        $region66: #{_loss_atal_forward.1} parent=59 // pred_check_branch
          %532 = sbr.rel (%p530) target = $region68
        $region67: #{_loss_atal_forward.1} parent=59 // pred_region
          %p533 = scmp.lt.s32.totalorder %s25, 1
          %s534 = scalar_select %p533, %s25, 1
          %s535 = scalar_lea.vmem %s5, %s534
        $region68: #{_loss_atal_forward.1} parent=59 // pred_fallthru
          _
      $region60: #{_loss_atal_forward.1} parent=5 // pred_fallthru
        _
    $region6: #{_loss_atal_forward.1} parent=1 // loop_footer
      %s23 = sadd.s32 1, %s19
    $region7: #{_loss_atal_forward.1} parent=1 // loop_footer_branch
      %18 = sbr.rel target = $region3
    $region8: #{_loss_atal_forward.1} parent=1 // loop_exit
      _
    %536 = vsyncpa [#allocation3], 1
    %s537 = scalar_lea.sflag [#allocation3], 1
    %538 = vsyncpa %s537, 1
    %539 = vsyncpa [#allocation7], 1
    %s540 = scalar_lea.sflag [#allocation7], 1
    %541 = vsyncpa %s540, 1
    %542 = vsyncpa [#allocation4], 1
    %s543 = scalar_lea.sflag [#allocation4], 1
    %544 = vsyncpa %s543, 1

</llo_original>
